<compile_context>
chip_gen: v7x
topology: tpu7x:2x2x1
jax: 0.10.0
libtpu: 0.0.40
codegen_flags: <defaults>
</compile_context>

<pallas_src>
import math

import jax
import jax.numpy as jnp
from jax.experimental import pallas as pl
from jax.experimental.pallas import tpu as pltpu


_LANE = 128
_TB_TARGET = 512                       # batch tile cap
_TO_TARGET = 512                       # out-features tile cap
_TK_TARGET = 1024                      # in-features (reduction) tile cap
_VMEM_LIMIT = 48 * 1024 * 1024         # leaves headroom on v7x (64 MiB VMEM)
_W_SCRATCH_BUDGET = 20 * 1024 * 1024   # weight scratch + warp staging budget


def _round_up(n, m):
    return ((n + m - 1) // m) * m


def _tile_and_pad(dim, base, target):
    """Tile size (multiple of `base`, capped at `target`) and the padded dim
    it divides evenly."""
    tile = min(_round_up(dim, base), target)
    return tile, _round_up(dim, tile)


def _feature_tiles(in_features, out_features):
    tk, i_pad = _tile_and_pad(in_features, _LANE, _TK_TARGET)
    to, o_pad = _tile_and_pad(out_features, _LANE, _TO_TARGET)
    return tk, i_pad, to, o_pad


# ---------------------------------------------------------------------------
# One-time parameter preparation (hoisted out of the forward path).
# ---------------------------------------------------------------------------
def prepare_params(warp, bias, in_features, out_features,
                   param_dtype=jnp.bfloat16):
    """Re-layout warp (O*I, L) -> pre-tiled (nk*no, L, tk, to) in the MXU
    compute dtype (bf16 default) and pad bias to (1, o_pad) in f32.
    Call once at parameter init, not per forward."""
    latent_size = warp.shape[-1]
    tk, i_pad, to, o_pad = _feature_tiles(in_features, out_features)
    nk, no = i_pad // tk, o_pad // to

    w = jnp.transpose(warp.reshape(out_features, in_features, latent_size),
                      (2, 1, 0))                                  # (L, I, O)
    w = jnp.pad(w.astype(param_dtype),
                ((0, 0), (0, i_pad - in_features), (0, o_pad - out_features)))
    # Pre-tile so the in-kernel DMA of one (L, tk, to) warp tile is a single
    # contiguous copy:  (L, i_pad, o_pad) -> (nk*no, L, tk, to).
    w = w.reshape(latent_size, nk, tk, no, to)
    w = jnp.transpose(w, (1, 3, 0, 2, 4)).reshape(nk * no, latent_size, tk, to)

    if bias is None:
        bias = jnp.zeros((out_features,), jnp.float32)
    bias_p = jnp.pad(bias.astype(jnp.float32),
                     (0, o_pad - out_features)).reshape(1, o_pad)
    return w, bias_p


# ---------------------------------------------------------------------------
# Fused kernel: weight generation (once) + tiled matmul + bias.
# ---------------------------------------------------------------------------
def _make_fused_kernel(latent_size, num_o, tk, gen_rows, persistent):
    def kernel(latent_ref, x_ref, bias_ref, warp_hbm, o_ref,
               w_scratch, warp_buf, dma_sem, acc_ref):
        b = pl.program_id(0)
        o = pl.program_id(1)
        k = pl.program_id(2)
        tile_idx = k * num_o + o
        w_idx = tile_idx if persistent else 0

        def generate_weight_tile():
            # Manual DMA of this (L, tk, to) warp tile from HBM.
            cp = pltpu.make_async_copy(warp_hbm.at[tile_idx], warp_buf,
                                       dma_sem.at[0])
            cp.start()
            cp.wait()
            # w[i, o] = sum_l latent[l] * warp[l, i, o]; row-chunked so the
            # f32 accumulator working set stays small (no forced spills).
            wv = w_scratch.at[w_idx]
            for r in range(0, tk, gen_rows):
                acc = latent_ref[0] * warp_buf[0, r:r + gen_rows, :]
                for l in range(1, latent_size):
                    acc = acc + latent_ref[l] * warp_buf[l, r:r + gen_rows, :]
                wv[r:r + gen_rows, :] = acc.astype(w_scratch.dtype)

        if persistent:
            # Generate each weight tile exactly once (first batch tile) and
            # reuse it for all later batch tiles -> no HBM round-trip.
            pl.when(b == 0)(generate_weight_tile)
        else:
            generate_weight_tile()

        @pl.when(k == 0)
        def _():
            # Fold the bias into the accumulator init (no epilogue add).
            acc_ref[...] = jnp.broadcast_to(bias_ref[...], acc_ref.shape)

        acc_ref[...] += jnp.dot(x_ref[...], w_scratch[w_idx],
                                preferred_element_type=jnp.float32)

        @pl.when(k == pl.num_programs(2) - 1)
        def _():
            o_ref[...] = acc_ref[...].astype(o_ref.dtype)

    return kernel


def _fused_linear(latent, x_p, bias_p, warp_tiled, *, tb, to, tk,
                  num_k, num_o, out_dtype):
    b_pad = x_p.shape[0]
    o_pad = bias_p.shape[1]
    num_b = b_pad // tb
    latent_size = warp_tiled.shape[1]
    compute_dtype = warp_tiled.dtype
    itemsize = jnp.dtype(compute_dtype).itemsize

    # Persistent full-weight scratch if it (plus warp staging) fits the VMEM
    # budget (v7x-safe); else regenerate the (k, o) tile every iteration.
    w_scratch_bytes = num_k * num_o * tk * to * itemsize
    warp_buf_bytes = latent_size * tk * to * itemsize
    persistent = (w_scratch_bytes + warp_buf_bytes) <= _W_SCRATCH_BUDGET
    n_w_tiles = num_k * num_o if persistent else 1

    if tk <= 256:
        gen_rows = tk
    elif tk % 256 == 0:
        gen_rows = 256
    else:
        gen_rows = 128

    i_pad = num_k * tk
    flops = 2 * b_pad * i_pad * o_pad + 2 * latent_size * i_pad * o_pad
    bytes_accessed = (x_p.size * x_p.dtype.itemsize
                      + warp_tiled.size * warp_tiled.dtype.itemsize
                      + bias_p.size * bias_p.dtype.itemsize
                      + b_pad * o_pad * jnp.dtype(out_dtype).itemsize)

    kernel = _make_fused_kernel(latent_size, num_o, tk, gen_rows, persistent)

    return pl.pallas_call(
        kernel,
        out_shape=jax.ShapeDtypeStruct((b_pad, o_pad), out_dtype),
        grid_spec=pltpu.PrefetchScalarGridSpec(
            num_scalar_prefetch=0,
            grid=(num_b, num_o, num_k),
            in_specs=[
                pl.BlockSpec(memory_space=pltpu.SMEM),             # latent (L,)
                pl.BlockSpec((tb, tk), lambda b, o, k: (b, k)),    # x tile
                pl.BlockSpec((1, to), lambda b, o, k: (0, o)),     # bias tile
                pl.BlockSpec(memory_space=pl.ANY),                 # warp (HBM)
            ],
            out_specs=pl.BlockSpec((tb, to), lambda b, o, k: (b, o)),
            scratch_shapes=[
                pltpu.VMEM((n_w_tiles, tk, to), compute_dtype),    # gen. weight
                pltpu.VMEM((latent_size, tk, to), compute_dtype),  # warp staging
                pltpu.SemaphoreType.DMA((1,)),
                pltpu.VMEM((tb, to), jnp.float32),                 # accumulator
            ]),
        compiler_params=pltpu.CompilerParams(
            dimension_semantics=("arbitrary", "parallel", "arbitrary"),
            vmem_limit_bytes=_VMEM_LIMIT),
        cost_estimate=pl.CostEstimate(flops=int(flops), transcendentals=0,
                                      bytes_accessed=int(bytes_accessed)),
    )(latent, x_p, bias_p, warp_tiled)


def share_linear_full(x, latent_params, warp_tiled, bias_padded, *,
                      in_features, out_features):
    """Forward of ShareLinearFull: x (..., in_features) -> (..., out_features).
    warp_tiled / bias_padded come from prepare_params() (one-time)."""
    out_dtype = x.dtype
    orig_shape = x.shape
    xf = x.reshape(-1, in_features)
    batch = xf.shape[0]

    compute_dtype = warp_tiled.dtype
    tk, i_pad, to, o_pad = _feature_tiles(in_features, out_features)
    sublane = 16 if jnp.dtype(compute_dtype).itemsize == 2 else 8
    tb, b_pad = _tile_and_pad(batch, sublane, _TB_TARGET)

    # The K (in_features) edge MUST be zero-padded for the reduction; padded
    # batch rows only produce garbage rows that are sliced off below.
    x_p = xf.astype(compute_dtype)
    if (b_pad, i_pad) != (batch, in_features):
        x_p = jnp.pad(x_p, ((0, b_pad - batch), (0, i_pad - in_features)))

    out_p = _fused_linear(latent_params.astype(jnp.float32), x_p, bias_padded,
                          warp_tiled, tb=tb, to=to, tk=tk,
                          num_k=i_pad // tk, num_o=o_pad // to,
                          out_dtype=out_dtype)
    out = out_p[:batch, :out_features]
    return out.reshape(*orig_shape[:-1], out_features)


# ---------------------------------------------------------------------------
# Reference + test
# ---------------------------------------------------------------------------
def _reference(x, latent_params, warp, bias, in_features, out_features):
    weight = jnp.dot(warp, latent_params,
                     precision=jax.lax.Precision.HIGHEST
                     ).reshape(out_features, in_features)
    y = jnp.dot(x.reshape(-1, in_features), weight.T,
                precision=jax.lax.Precision.HIGHEST) + bias
    return y.reshape(*x.shape[:-1], out_features)


if __name__ == "__main__":
    in_features = 32
    out_features = 16
    latent_size = 3

    key = jax.random.PRNGKey(0)
    k_warp, k_lat, k_bias, k_x = jax.random.split(key, 4)

    # Deterministic parameter init mirroring reset_parameters():
    warp = 0.01 * jax.random.normal(
        k_warp, (in_features * out_features, latent_size), dtype=jnp.float32)
    latent_params = (1.0 / out_features) * jax.random.normal(
        k_lat, (latent_size,), dtype=jnp.float32)
    bound = 1.0 / math.sqrt(in_features)   # fan_in of (O, I) weight
    bias = jax.random.uniform(k_bias, (out_features,), dtype=jnp.float32,
                              minval=-bound, maxval=bound)

    x = jax.random.normal(k_x, (2, 4, in_features), dtype=jnp.float32)

    # One-time parameter preparation (bf16 MXU operands by default).
    warp_t, bias_p = prepare_params(warp, bias, in_features, out_features)

    y = share_linear_full(x, latent_params, warp_t, bias_p,
                          in_features=in_features, out_features=out_features)
    y = jax.block_until_ready(y)

    y_ref = _reference(x, latent_params, warp, bias, in_features, out_features)
    assert y.shape == (2, 4, out_features)
    # bf16 MXU operands (f32 accumulate, f32 bias) vs HIGHEST-precision f32
    # reference -> widened tolerance.
    assert jnp.allclose(y, y_ref, atol=5e-3, rtol=5e-2), "mismatch vs reference"

    print("KERNEL_OK")
</pallas_src>

<mosaic_0001>
module attributes {stable_mosaic.version = 11 : i64} {
  func.func @kernel(%arg0: i32, %arg1: i32, %arg2: i32, %arg3: memref<3xf32, #tpu.memory_space<smem>>, %arg4: memref<16x128xbf16, #tpu.memory_space<vmem>>, %arg5: memref<1x128xf32, #tpu.memory_space<vmem>>, %arg6: memref<1x3x128x128xbf16, #tpu.memory_space<any>>, %arg7: memref<16x128xf32, #tpu.memory_space<vmem>>, %arg8: memref<1x128x128xbf16, #tpu.memory_space<vmem>>, %arg9: memref<3x128x128xbf16, #tpu.memory_space<vmem>>, %arg10: memref<1x!tpu.dma_semaphore, #tpu.memory_space<semaphore_mem>>, %arg11: memref<16x128xf32, #tpu.memory_space<vmem>>) attributes {dimension_semantics = [#tpu.dimension_semantics<arbitrary>, #tpu.dimension_semantics<parallel>, #tpu.dimension_semantics<arbitrary>], iteration_bounds = array<i64: 1, 1, 1>, scalar_prefetch = 0 : i64, scratch_operands = 4 : i64, tpu.core_type = #tpu.core_type<tc>, window_params = [{transform_indices = @transform_0, window_bounds = array<i64: 3>}, {transform_indices = @transform_1, window_bounds = array<i64: 16, 128>}, {transform_indices = @transform_2, window_bounds = array<i64: 1, 128>}, {}, {transform_indices = @transform_4, window_bounds = array<i64: 16, 128>}]} {
    %c1_i32 = arith.constant 1 : i32
    %0 = arith.muli %arg2, %c1_i32 : i32
    %1 = arith.addi %0, %arg1 : i32
    %c0_i32 = arith.constant 0 : i32
    %2 = arith.cmpi eq, %arg0, %c0_i32 : i32
    %3 = arith.extui %2 : i1 to i32
    %c0_i32_0 = arith.constant 0 : i32
    %4 = arith.cmpi ne, %3, %c0_i32_0 : i32
    scf.if %4 {
      %c0_i32_12 = arith.constant 0 : i32
      %c0_i32_13 = arith.constant 0 : i32
      %c0_i32_14 = arith.constant 0 : i32
      %c0_i32_15 = arith.constant 0 : i32
      %19 = tpu.memref_slice %arg6[%1, %c0_i32_13, %c0_i32_14, %c0_i32_15] : memref<1x3x128x128xbf16, #tpu.memory_space<any>> -> memref<1x3x128x128xbf16, #tpu.memory_space<any>>
      %20 = tpu.memref_squeeze %19 : memref<1x3x128x128xbf16, #tpu.memory_space<any>> -> memref<3x128x128xbf16, #tpu.memory_space<any>>
      %21 = tpu.memref_slice %arg10[%c0_i32_12] : memref<1x!tpu.dma_semaphore, #tpu.memory_space<semaphore_mem>> -> memref<1x!tpu.dma_semaphore, #tpu.memory_space<semaphore_mem>>
      %22 = tpu.memref_squeeze %21 : memref<1x!tpu.dma_semaphore, #tpu.memory_space<semaphore_mem>> -> memref<!tpu.dma_semaphore, #tpu.memory_space<semaphore_mem>>
      tpu.enqueue_dma source(%20 : memref<3x128x128xbf16, #tpu.memory_space<any>>) target(%arg9 : memref<3x128x128xbf16, #tpu.memory_space<vmem>>) target_semaphore(%22 : memref<!tpu.dma_semaphore, #tpu.memory_space<semaphore_mem>>)
      %c0_i32_16 = arith.constant 0 : i32
      %c0_i32_17 = arith.constant 0 : i32
      %c0_i32_18 = arith.constant 0 : i32
      %c0_i32_19 = arith.constant 0 : i32
      %23 = tpu.memref_slice %arg6[%1, %c0_i32_17, %c0_i32_18, %c0_i32_19] : memref<1x3x128x128xbf16, #tpu.memory_space<any>> -> memref<1x3x128x128xbf16, #tpu.memory_space<any>>
      %24 = tpu.memref_squeeze %23 : memref<1x3x128x128xbf16, #tpu.memory_space<any>> -> memref<3x128x128xbf16, #tpu.memory_space<any>>
      %25 = tpu.memref_slice %arg10[%c0_i32_16] : memref<1x!tpu.dma_semaphore, #tpu.memory_space<semaphore_mem>> -> memref<1x!tpu.dma_semaphore, #tpu.memory_space<semaphore_mem>>
      %26 = tpu.memref_squeeze %25 : memref<1x!tpu.dma_semaphore, #tpu.memory_space<semaphore_mem>> -> memref<!tpu.dma_semaphore, #tpu.memory_space<semaphore_mem>>
      tpu.wait_dma2 semaphore(%26 : memref<!tpu.dma_semaphore, #tpu.memory_space<semaphore_mem>>) src(%24 : memref<3x128x128xbf16, #tpu.memory_space<any>>) dst(%arg9 : memref<3x128x128xbf16, #tpu.memory_space<vmem>>)
      %c0_20 = arith.constant 0 : index
      %27 = memref.load %arg3[%c0_20] : memref<3xf32, #tpu.memory_space<smem>>
      %c0_21 = arith.constant 0 : index
      %c0_22 = arith.constant 0 : index
      %c0_23 = arith.constant 0 : index
      %28 = vector.load %arg9[%c0_21, %c0_22, %c0_23] : memref<3x128x128xbf16, #tpu.memory_space<vmem>>, vector<1x128x128xbf16>
      %29 = vector.shape_cast %28 : vector<1x128x128xbf16> to vector<128x128xbf16>
      %30 = arith.extf %29 : vector<128x128xbf16> to vector<128x128xf32>
      %31 = vector.broadcast %27 : f32 to vector<128x128xf32>
      %32 = arith.mulf %31, %30 : vector<128x128xf32>
      %c1 = arith.constant 1 : index
      %33 = memref.load %arg3[%c1] : memref<3xf32, #tpu.memory_space<smem>>
      %c1_24 = arith.constant 1 : index
      %c0_25 = arith.constant 0 : index
      %c0_26 = arith.constant 0 : index
      %34 = vector.load %arg9[%c1_24, %c0_25, %c0_26] : memref<3x128x128xbf16, #tpu.memory_space<vmem>>, vector<1x128x128xbf16>
      %35 = vector.shape_cast %34 : vector<1x128x128xbf16> to vector<128x128xbf16>
      %36 = arith.extf %35 : vector<128x128xbf16> to vector<128x128xf32>
      %37 = vector.broadcast %33 : f32 to vector<128x128xf32>
      %38 = arith.mulf %37, %36 : vector<128x128xf32>
      %39 = arith.addf %32, %38 : vector<128x128xf32>
      %c2 = arith.constant 2 : index
      %40 = memref.load %arg3[%c2] : memref<3xf32, #tpu.memory_space<smem>>
      %c2_27 = arith.constant 2 : index
      %c0_28 = arith.constant 0 : index
      %c0_29 = arith.constant 0 : index
      %41 = vector.load %arg9[%c2_27, %c0_28, %c0_29] : memref<3x128x128xbf16, #tpu.memory_space<vmem>>, vector<1x128x128xbf16>
      %42 = vector.shape_cast %41 : vector<1x128x128xbf16> to vector<128x128xbf16>
      %43 = arith.extf %42 : vector<128x128xbf16> to vector<128x128xf32>
      %44 = vector.broadcast %40 : f32 to vector<128x128xf32>
      %45 = arith.mulf %44, %43 : vector<128x128xf32>
      %46 = arith.addf %39, %45 : vector<128x128xf32>
      %47 = arith.truncf %46 : vector<128x128xf32> to vector<128x128xbf16>
      %c0_i32_30 = arith.constant 0 : i32
      %c0_i32_31 = arith.constant 0 : i32
      %48 = tpu.memref_slice %arg8[%1, %c0_i32_30, %c0_i32_31] : memref<1x128x128xbf16, #tpu.memory_space<vmem>> -> memref<1x128x128xbf16, #tpu.memory_space<vmem>>
      %49 = tpu.memref_squeeze %48 : memref<1x128x128xbf16, #tpu.memory_space<vmem>> -> memref<128x128xbf16, #tpu.memory_space<vmem>>
      %c0_32 = arith.constant 0 : index
      %c0_33 = arith.constant 0 : index
      %50 = vector.load %49[%c0_32, %c0_33] : memref<128x128xbf16, #tpu.memory_space<vmem>>, vector<128x128xbf16>
      tpu.vector_store %49[%c0_32, %c0_33], %47 {strides = array<i32>} : memref<128x128xbf16, #tpu.memory_space<vmem>>, vector<128x128xbf16>,
    } else {
    }
    %c0_i32_1 = arith.constant 0 : i32
    %5 = arith.cmpi eq, %arg2, %c0_i32_1 : i32
    %6 = arith.extui %5 : i1 to i32
    %c0_i32_2 = arith.constant 0 : i32
    %7 = arith.cmpi ne, %6, %c0_i32_2 : i32
    scf.if %7 {
      %c0_12 = arith.constant 0 : index
      %c0_13 = arith.constant 0 : index
      %19 = vector.load %arg5[%c0_12, %c0_13] : memref<1x128xf32, #tpu.memory_space<vmem>>, vector<1x128xf32>
      %20 = vector.shape_cast %19 : vector<1x128xf32> to vector<1x128xf32>
      %21 = vector.broadcast %20 : vector<1x128xf32> to vector<16x128xf32>
      %c0_14 = arith.constant 0 : index
      %c0_15 = arith.constant 0 : index
      %22 = vector.load %arg11[%c0_14, %c0_15] : memref<16x128xf32, #tpu.memory_space<vmem>>, vector<16x128xf32>
      tpu.vector_store %arg11[%c0_14, %c0_15], %21 {strides = array<i32>} : memref<16x128xf32, #tpu.memory_space<vmem>>, vector<16x128xf32>,
    } else {
    }
    %c0 = arith.constant 0 : index
    %c0_3 = arith.constant 0 : index
    %8 = vector.load %arg11[%c0, %c0_3] : memref<16x128xf32, #tpu.memory_space<vmem>>, vector<16x128xf32>
    %c0_4 = arith.constant 0 : index
    %c0_5 = arith.constant 0 : index
    %9 = vector.load %arg4[%c0_4, %c0_5] : memref<16x128xbf16, #tpu.memory_space<vmem>>, vector<16x128xbf16>
    %10 = arith.index_cast %1 : i32 to index
    %c0_6 = arith.constant 0 : index
    %c0_7 = arith.constant 0 : index
    %11 = vector.load %arg8[%10, %c0_6, %c0_7] : memref<1x128x128xbf16, #tpu.memory_space<vmem>>, vector<1x128x128xbf16>
    %12 = vector.shape_cast %11 : vector<1x128x128xbf16> to vector<128x128xbf16>
    %cst = arith.constant dense<0.000000e+00> : vector<16x128xf32>
    %13 = tpu.matmul %9, %12, %cst {dimension_numbers = #tpu.dot_dimension_numbers<[1], [0], [0], [1], [0, 0, 1, 1], [], []>} : vector<16x128xbf16>, vector<128x128xbf16>, vector<16x128xf32> -> vector<16x128xf32>
    %14 = arith.addf %8, %13 : vector<16x128xf32>
    %c0_8 = arith.constant 0 : index
    %c0_9 = arith.constant 0 : index
    %15 = vector.load %arg11[%c0_8, %c0_9] : memref<16x128xf32, #tpu.memory_space<vmem>>, vector<16x128xf32>
    tpu.vector_store %arg11[%c0_8, %c0_9], %14 {strides = array<i32>} : memref<16x128xf32, #tpu.memory_space<vmem>>, vector<16x128xf32>,
    %c0_i32_10 = arith.constant 0 : i32
    %16 = arith.cmpi eq, %arg2, %c0_i32_10 : i32
    %17 = arith.extui %16 : i1 to i32
    %c0_i32_11 = arith.constant 0 : i32
    %18 = arith.cmpi ne, %17, %c0_i32_11 : i32
    scf.if %18 {
      %c0_12 = arith.constant 0 : index
      %c0_13 = arith.constant 0 : index
      %19 = vector.load %arg11[%c0_12, %c0_13] : memref<16x128xf32, #tpu.memory_space<vmem>>, vector<16x128xf32>
      %c0_14 = arith.constant 0 : index
      %c0_15 = arith.constant 0 : index
      %20 = vector.load %arg7[%c0_14, %c0_15] : memref<16x128xf32, #tpu.memory_space<vmem>>, vector<16x128xf32>
      tpu.vector_store %arg7[%c0_14, %c0_15], %19 {strides = array<i32>} : memref<16x128xf32, #tpu.memory_space<vmem>>, vector<16x128xf32>,
    } else {
    }
    return
  }
  func.func @transform_0(%arg0: i32, %arg1: i32, %arg2: i32) -> i32 {
    %c0_i32 = arith.constant 0 : i32
    %c0_i32_0 = arith.constant 0 : i32
    return %c0_i32 : i32
  }
  func.func @transform_1(%arg0: i32, %arg1: i32, %arg2: i32) -> (i32, i32) {
    %c0_i32 = arith.constant 0 : i32
    return %arg0, %arg2 : i32, i32
  }
  func.func @transform_2(%arg0: i32, %arg1: i32, %arg2: i32) -> (i32, i32) {
    %c0_i32 = arith.constant 0 : i32
    %c0_i32_0 = arith.constant 0 : i32
    return %c0_i32, %arg1 : i32, i32
  }
  func.func @transform_4(%arg0: i32, %arg1: i32, %arg2: i32) -> (i32, i32) {
    %c0_i32 = arith.constant 0 : i32
    return %arg0, %arg1 : i32, i32
  }
}

</mosaic_0001>

<llo_original>
// kernel: tpu_custom_call.1
$region0: #{tpu_custom_call.1}
  #allocation0 [shape = 'u32[]', space=smem, size = 0x4, offset = 0x4, fixed_abs, tag = 'smem constant byte address 0x4 - core index']
  #allocation1 [shape = 'u32[144,128]{1,0:T(1,128)}', space=vmem, size = 0x12000, scoped, tag = 'internal scratch']
  #allocation2 [shape = 'bf16[1,128,128]{2,1,0:T(16,128)(2,1)}', space=vmem, size = 0x8000, scoped, tag = 'scratch operand']
  #allocation3 [shape = 'bf16[3,128,128]{2,1,0:T(16,128)(2,1)}', space=vmem, size = 0x18000, scoped, tag = 'scratch operand']
  #allocation4 [shape = 's32[1]{0}', space=sflag, size = 0x4, scoped, tag = 'scratch operand']
  #allocation5 [shape = 'f32[16,128]{1,0:T(8,128)}', space=vmem, size = 0x2000, scoped, tag = 'scratch operand']
  #allocation12 [shape = 's32[]', space=sflag, size = 0x4, offset = 0, fixed_abs, tag = 'sflag constant byte address 0x0 - dummy sync flag']
  #allocation13 [shape = 's32[]', space=sflag, size = 0x4, offset = 0, fixed_abs, tag = 'sflag constant byte address 0x0 - dummy sync flag']
  #allocation14 [shape = 'u32[]', space=smem, size = 0x4, offset = 0x44, fixed_abs, tag = 'smem constant byte address 0x44 - assertion arg 0']
  #allocation15 [shape = 'u32[]', space=smem, size = 0x4, offset = 0x48, fixed_abs, tag = 'smem constant byte address 0x48 - assertion arg 1']
  %s0 = inlined_call_operand.hbm [shape: f32[3], index: 0, kind: input, shape index: {}]
  %s1 = inlined_call_operand.hbm [shape: bf16[16,128], index: 1, kind: input, shape index: {}]
  %s2 = inlined_call_operand.vmem [shape: f32[1,128], index: 2, kind: input, shape index: {}]
  %s3 = inlined_call_operand.hbm [shape: bf16[1,3,128,128], index: 3, kind: input, shape index: {}]
  %s4 = inlined_call_operand.hbm [shape: f32[16,128], index: 4, kind: output, shape index: {}]
  %s5 = sld [smem:[#allocation0]]
  $region46: #{tpu_custom_call.1} parent=0
    _
  %s7 = ssub.s32 1, %s5
  %s8 = scalar_select 0, %s7, %s5
  $region1: #{tpu_custom_call.1} parent=0
    #allocation6 [shape = 'u8[512]{0}', space=smem, size = 0x200, scoped, tag = 'input window, operand 0, single buffered']
    #allocation7 [shape = 's32[1]{0}', space=sflag, size = 0x4, scoped, tag = 'scoped memory for tpu_custom_call.1']
    #allocation8 [shape = 's32[1]{0}', space=sflag, size = 0x4, scoped, tag = 'scoped memory for tpu_custom_call.1']
    #allocation9 [shape = 's32[1]{0}', space=sflag, size = 0x4, scoped, tag = 'scoped memory for tpu_custom_call.1']
    #allocation10 [shape = 'u8[4096]{0}', space=vmem, size = 0x1000, scoped, tag = 'input window, operand 1, single buffered']
    #allocation11 [shape = 'u8[8192]{0}', space=vmem, size = 0x2000, scoped, tag = 'output window, operand 0, single buffered']
    %9 = vsyncpa [#allocation9], 0
    %10 = vsyncpa [#allocation7], 0
    %11 = vsyncpa [#allocation8], 0
    // Predicated region
    $region2: #{tpu_custom_call.1} parent=1 // pred_check
      _
    $region3: #{tpu_custom_call.1} parent=1 // pred_check_branch
      %13 = sbr.rel (0) target = $region5
    $region4: #{tpu_custom_call.1} parent=1 // pred_region
      %s15 = ssub.s32 16, 16
      %16 = vsyncadd [#allocation9], %s15
      %19 = dma.hbm_to_smem %s0, 16, [#allocation6], [#allocation9]
    $region5: #{tpu_custom_call.1} parent=1 // pred_fallthru
      _
    // Predicated region
    $region6: #{tpu_custom_call.1} parent=1 // pred_check
      _
    $region7: #{tpu_custom_call.1} parent=1 // pred_check_branch
      %21 = sbr.rel (0) target = $region9
    $region8: #{tpu_custom_call.1} parent=1 // pred_region
      %s23 = ssub.s32 128, 128
      %24 = vsyncadd [#allocation7], %s23
      %s25 = sshll.u32 [#allocation10], 4
      %s26 = int_to_ptr.vmem [resolvable:$true] %s25
      %31 = dma.hbm_to_vmem [thread:$0]  %s1, 128, %s26, [#allocation7], 64, 64, 4
    $region9: #{tpu_custom_call.1} parent=1 // pred_fallthru
      _
    // Predicated region
    $region10: #{tpu_custom_call.1} parent=1 // pred_check
      _
    $region11: #{tpu_custom_call.1} parent=1 // pred_check_branch
      %33 = sbr.rel (0) target = $region13
    $region12: #{tpu_custom_call.1} parent=1 // pred_region
      _
    $region13: #{tpu_custom_call.1} parent=1 // pred_fallthru
      _
    // Predicated region
    $region14: #{tpu_custom_call.1} parent=1 // pred_check
      _
    $region15: #{tpu_custom_call.1} parent=1 // pred_check_branch
      %35 = sbr.rel (0) target = $region17
    $region16: #{tpu_custom_call.1} parent=1 // pred_region
      %36 = dma.done [#allocation9], 16
    $region17: #{tpu_custom_call.1} parent=1 // pred_fallthru
      _
    // Predicated region
    $region18: #{tpu_custom_call.1} parent=1 // pred_check
      _
    $region19: #{tpu_custom_call.1} parent=1 // pred_check_branch
      %38 = sbr.rel (0) target = $region21
    $region20: #{tpu_custom_call.1} parent=1 // pred_region
      %39 = dma.done [#allocation7], 128
    $region21: #{tpu_custom_call.1} parent=1 // pred_fallthru
      _
    %40 = sfence
    %s42 = sadd.s32 0, 0
    %p43 = scmp.eq.s32.totalorder 0, 0
    // Predicated region
    $region22: #{tpu_custom_call.1} parent=1 // pred_check
      %p44 = pneg %p43
    $region23: #{tpu_custom_call.1} parent=1 // pred_check_branch
      %46 = sbr.rel (%p44) target = $region25
    $region24: #{tpu_custom_call.1} parent=1 // pred_region
      %s47 = smul.u32 %s42, 48
      %s48 = smul.addr %s47, 64
      %s49 = scalar_lea.hbm %s3, %s48
      // Predicated region
      $region26: #{tpu_custom_call.1} parent=24 // pred_check
        _
      $region27: #{tpu_custom_call.1} parent=24 // pred_check_branch
        %51 = sbr.rel target = $region29
      $region28: #{tpu_custom_call.1} parent=24 // pred_region
        %52 = sst [smem:[#allocation14]] [#allocation13]
        %53 = sst [smem:[#allocation15]] [#allocation12]
      $region29: #{tpu_custom_call.1} parent=24 // pred_fallthru
        _
      %55 = shalt.err (0)
      %s57 = sshll.u32 [#allocation3], 4
      %s58 = int_to_ptr.vmem [resolvable:$true] %s57
      %60 = dma.hbm_to_vmem [thread:$0]  %s49, 3072, %s58, [#allocation4]
      %s61 = smul.u32 4, 3
      %s62 = smul.u32 %s61, 16
      %s63 = smul.u32 %s62, 1
      %s64 = sshll.u32 %s63, 4
      %65 = dma.done [#allocation4], %s64
      %s66 = sld [smem:[#allocation6]]
      %v67 = vld [vmem:[#allocation3] sm:$0xff]
      %v68 = vld [vmem:[#allocation3 + $0x8] sm:$0xff]
      %v69 = vld [vmem:[#allocation3 + $0x10] sm:$0xff]
      %v70 = vld [vmem:[#allocation3 + $0x18] sm:$0xff]
      %v71 = vld [vmem:[#allocation3 + $0x20] sm:$0xff]
      %v72 = vld [vmem:[#allocation3 + $0x28] sm:$0xff]
      %v73 = vld [vmem:[#allocation3 + $0x30] sm:$0xff]
      %v74 = vld [vmem:[#allocation3 + $0x38] sm:$0xff]
      %v75 = vunpack.c.l.bf16 %v67
      %v76 = vunpack.c.h.bf16 %v67
      %v77 = vunpack.c.l.bf16 %v68
      %v78 = vunpack.c.h.bf16 %v68
      %v79 = vunpack.c.l.bf16 %v69
      %v80 = vunpack.c.h.bf16 %v69
      %v81 = vunpack.c.l.bf16 %v70
      %v82 = vunpack.c.h.bf16 %v70
      %v83 = vunpack.c.l.bf16 %v71
      %v84 = vunpack.c.h.bf16 %v71
      %v85 = vunpack.c.l.bf16 %v72
      %v86 = vunpack.c.h.bf16 %v72
      %v87 = vunpack.c.l.bf16 %v73
      %v88 = vunpack.c.h.bf16 %v73
      %v89 = vunpack.c.l.bf16 %v74
      %v90 = vunpack.c.h.bf16 %v74
      %v91 = vstv %s66
      %v92 = vmul.f32 %v91, %v75
      %v93 = vmul.f32 %v91, %v76
      %v94 = vmul.f32 %v91, %v77
      %v95 = vmul.f32 %v91, %v78
      %v96 = vmul.f32 %v91, %v79
      %v97 = vmul.f32 %v91, %v80
      %v98 = vmul.f32 %v91, %v81
      %v99 = vmul.f32 %v91, %v82
      %v100 = vmul.f32 %v91, %v83
      %v101 = vmul.f32 %v91, %v84
      %v102 = vmul.f32 %v91, %v85
      %v103 = vmul.f32 %v91, %v86
      %v104 = vmul.f32 %v91, %v87
      %v105 = vmul.f32 %v91, %v88
      %v106 = vmul.f32 %v91, %v89
      %v107 = vmul.f32 %v91, %v90
      %s108 = sld [smem:[#allocation6 + $0x1]]
      %s109 = scalar_lea.vmem [#allocation3], 64
      %v110 = vld [vmem:[%s109] sm:$0xff]
      %v111 = vld [vmem:[%s109 + $0x8] sm:$0xff]
      %v112 = vld [vmem:[%s109 + $0x10] sm:$0xff]
      %v113 = vld [vmem:[%s109 + $0x18] sm:$0xff]
      %v114 = vld [vmem:[%s109 + $0x20] sm:$0xff]
      %v115 = vld [vmem:[%s109 + $0x28] sm:$0xff]
      %v116 = vld [vmem:[%s109 + $0x30] sm:$0xff]
      %v117 = vld [vmem:[%s109 + $0x38] sm:$0xff]
      %v118 = vunpack.c.l.bf16 %v110
      %v119 = vunpack.c.h.bf16 %v110
      %v120 = vunpack.c.l.bf16 %v111
      %v121 = vunpack.c.h.bf16 %v111
      %v122 = vunpack.c.l.bf16 %v112
      %v123 = vunpack.c.h.bf16 %v112
      %v124 = vunpack.c.l.bf16 %v113
      %v125 = vunpack.c.h.bf16 %v113
      %v126 = vunpack.c.l.bf16 %v114
      %v127 = vunpack.c.h.bf16 %v114
      %v128 = vunpack.c.l.bf16 %v115
      %v129 = vunpack.c.h.bf16 %v115
      %v130 = vunpack.c.l.bf16 %v116
      %v131 = vunpack.c.h.bf16 %v116
      %v132 = vunpack.c.l.bf16 %v117
      %v133 = vunpack.c.h.bf16 %v117
      %v134 = vstv %s108
      %v135 = vmul.f32 %v134, %v118
      %v136 = vmul.f32 %v134, %v119
      %v137 = vmul.f32 %v134, %v120
      %v138 = vmul.f32 %v134, %v121
      %v139 = vmul.f32 %v134, %v122
      %v140 = vmul.f32 %v134, %v123
      %v141 = vmul.f32 %v134, %v124
      %v142 = vmul.f32 %v134, %v125
      %v143 = vmul.f32 %v134, %v126
      %v144 = vmul.f32 %v134, %v127
      %v145 = vmul.f32 %v134, %v128
      %v146 = vmul.f32 %v134, %v129
      %v147 = vmul.f32 %v134, %v130
      %v148 = vmul.f32 %v134, %v131
      %v149 = vmul.f32 %v134, %v132
      %v150 = vmul.f32 %v134, %v133
      %v151 = vadd.f32 %v92, %v135
      %v152 = vadd.f32 %v93, %v136
      %v153 = vadd.f32 %v94, %v137
      %v154 = vadd.f32 %v95, %v138
      %v155 = vadd.f32 %v96, %v139
      %v156 = vadd.f32 %v97, %v140
      %v157 = vadd.f32 %v98, %v141
      %v158 = vadd.f32 %v99, %v142
      %v159 = vadd.f32 %v100, %v143
      %v160 = vadd.f32 %v101, %v144
      %v161 = vadd.f32 %v102, %v145
      %v162 = vadd.f32 %v103, %v146
      %v163 = vadd.f32 %v104, %v147
      %v164 = vadd.f32 %v105, %v148
      %v165 = vadd.f32 %v106, %v149
      %v166 = vadd.f32 %v107, %v150
      %s167 = sld [smem:[#allocation6 + $0x2]]
      %s168 = scalar_lea.vmem [#allocation3], 128
      %v169 = vld [vmem:[%s168] sm:$0xff]
      %v170 = vld [vmem:[%s168 + $0x8] sm:$0xff]
      %v171 = vld [vmem:[%s168 + $0x10] sm:$0xff]
      %v172 = vld [vmem:[%s168 + $0x18] sm:$0xff]
      %v173 = vld [vmem:[%s168 + $0x20] sm:$0xff]
      %v174 = vld [vmem:[%s168 + $0x28] sm:$0xff]
      %v175 = vld [vmem:[%s168 + $0x30] sm:$0xff]
      %v176 = vld [vmem:[%s168 + $0x38] sm:$0xff]
      %v177 = vunpack.c.l.bf16 %v169
      %v178 = vunpack.c.h.bf16 %v169
      %v179 = vunpack.c.l.bf16 %v170
      %v180 = vunpack.c.h.bf16 %v170
      %v181 = vunpack.c.l.bf16 %v171
      %v182 = vunpack.c.h.bf16 %v171
      %v183 = vunpack.c.l.bf16 %v172
      %v184 = vunpack.c.h.bf16 %v172
      %v185 = vunpack.c.l.bf16 %v173
      %v186 = vunpack.c.h.bf16 %v173
      %v187 = vunpack.c.l.bf16 %v174
      %v188 = vunpack.c.h.bf16 %v174
      %v189 = vunpack.c.l.bf16 %v175
      %v190 = vunpack.c.h.bf16 %v175
      %v191 = vunpack.c.l.bf16 %v176
      %v192 = vunpack.c.h.bf16 %v176
      %v193 = vstv %s167
      %v194 = vmul.f32 %v193, %v177
      %v195 = vmul.f32 %v193, %v178
      %v196 = vmul.f32 %v193, %v179
      %v197 = vmul.f32 %v193, %v180
      %v198 = vmul.f32 %v193, %v181
      %v199 = vmul.f32 %v193, %v182
      %v200 = vmul.f32 %v193, %v183
      %v201 = vmul.f32 %v193, %v184
      %v202 = vmul.f32 %v193, %v185
      %v203 = vmul.f32 %v193, %v186
      %v204 = vmul.f32 %v193, %v187
      %v205 = vmul.f32 %v193, %v188
      %v206 = vmul.f32 %v193, %v189
      %v207 = vmul.f32 %v193, %v190
      %v208 = vmul.f32 %v193, %v191
      %v209 = vmul.f32 %v193, %v192
      %v210 = vadd.f32 %v151, %v194
      %v211 = vadd.f32 %v152, %v195
      %v212 = vadd.f32 %v153, %v196
      %v213 = vadd.f32 %v154, %v197
      %v214 = vadd.f32 %v155, %v198
      %v215 = vadd.f32 %v156, %v199
      %v216 = vadd.f32 %v157, %v200
      %v217 = vadd.f32 %v158, %v201
      %v218 = vadd.f32 %v159, %v202
      %v219 = vadd.f32 %v160, %v203
      %v220 = vadd.f32 %v161, %v204
      %v221 = vadd.f32 %v162, %v205
      %v222 = vadd.f32 %v163, %v206
      %v223 = vadd.f32 %v164, %v207
      %v224 = vadd.f32 %v165, %v208
      %v225 = vadd.f32 %v166, %v209
      %v226 = vpack.c.bf16 %v211, %v210
      %v227 = vpack.c.bf16 %v213, %v212
      %v228 = vpack.c.bf16 %v215, %v214
      %v229 = vpack.c.bf16 %v217, %v216
      %v230 = vpack.c.bf16 %v219, %v218
      %v231 = vpack.c.bf16 %v221, %v220
      %v232 = vpack.c.bf16 %v223, %v222
      %v233 = vpack.c.bf16 %v225, %v224
      %s234 = smul.u32 %s42, 8
      %s235 = smul.addr %s234, 8
      %s236 = scalar_lea.vmem [#allocation2], %s235
      %237 = vst [vmem:[%s236] sm:$0xff] %v226
      %238 = vst [vmem:[%s236 + $0x8] sm:$0xff] %v227
      %239 = vst [vmem:[%s236 + $0x10] sm:$0xff] %v228
      %240 = vst [vmem:[%s236 + $0x18] sm:$0xff] %v229
      %241 = vst [vmem:[%s236 + $0x20] sm:$0xff] %v230
      %242 = vst [vmem:[%s236 + $0x28] sm:$0xff] %v231
      %243 = vst [vmem:[%s236 + $0x30] sm:$0xff] %v232
      %244 = vst [vmem:[%s236 + $0x38] sm:$0xff] %v233
    $region25: #{tpu_custom_call.1} parent=1 // pred_fallthru
      _
    %p245 = scmp.eq.s32.totalorder 0, 0
    // Predicated region
    $region30: #{tpu_custom_call.1} parent=1 // pred_check
      %p246 = pneg %p245
    $region31: #{tpu_custom_call.1} parent=1 // pred_check_branch
      %248 = sbr.rel (%p246) target = $region33
    $region32: #{tpu_custom_call.1} parent=1 // pred_region
      %v249 = vld [vmem:[%s2] sm:$0x1]
      %v251 = vlaneseq
      %v252 = vshrl.u32 %v251, 7
      %v253 = vsub.s32 0, %v252
      %v254 = vrot.slane %v249, %v253
      %256 = vst [vmem:[#allocation5] sm:$0xff] %v254
      %257 = vst [vmem:[#allocation5 + $0x8] sm:$0xff] %v254
    $region33: #{tpu_custom_call.1} parent=1 // pred_fallthru
      _
    %v258 = vld [vmem:[#allocation5] sm:$0xff]
    %v259 = vld [vmem:[#allocation5 + $0x8] sm:$0xff]
    %v260 = vld [vmem:[#allocation10] sm:$0xf]
    %v261 = vld [vmem:[#allocation10 + $0x4] sm:$0xf]
    %s262 = smul.u32 %s42, 8
    %s263 = smul.addr %s262, 8
    %s264 = scalar_lea.vmem [#allocation2], %s263
    %v265 = vld [vmem:[%s264] sm:$0xff]
    %v266 = vld [vmem:[%s264 + $0x8] sm:$0xff]
    %v267 = vld [vmem:[%s264 + $0x10] sm:$0xff]
    %v268 = vld [vmem:[%s264 + $0x18] sm:$0xff]
    %v269 = vld [vmem:[%s264 + $0x20] sm:$0xff]
    %v270 = vld [vmem:[%s264 + $0x28] sm:$0xff]
    %v271 = vld [vmem:[%s264 + $0x30] sm:$0xff]
    %v272 = vld [vmem:[%s264 + $0x38] sm:$0xff]
    %v275 = vunpack.c.l.b16 %v260
    %v276 = vunpack.c.l.b16 %v261
    %v277 = vpack.c.b16 %v276, %v275
    %279 = vmatprep.subr.bf16.mxu0 0
    %280 = vmatpush1.bf16.msra.mxu0 %v265
    %281 = vmatprep.subr.bf16.mxu0 0
    %282 = vmatpush1.bf16.msra.mxu0 %v266
    %283 = vmatprep.subr.bf16.mxu0 0
    %284 = vmatpush1.bf16.msra.mxu0 %v267
    %285 = vmatprep.subr.bf16.mxu0 0
    %286 = vmatpush1.bf16.msra.mxu0 %v268
    %287 = vmatprep.subr.bf16.mxu0 0
    %288 = vmatpush1.bf16.msra.mxu0 %v269
    %289 = vmatprep.subr.bf16.mxu0 0
    %290 = vmatpush1.bf16.msra.mxu0 %v270
    %291 = vmatprep.subr.bf16.mxu0 0
    %292 = vmatpush1.bf16.msra.mxu0 %v271
    %293 = vmatprep.subr.bf16.mxu0 0
    %294 = vmatpush1.bf16.msra.mxu0 %v272
    %295 = vmatprep.subr.bf16.mxu0 0
    %296 = vmatpush1.bf16.msra.mxu0 0
    %297 = vmatprep.subr.bf16.mxu0 0
    %298 = vmatpush1.bf16.msra.mxu0 0
    %299 = vmatprep.subr.bf16.mxu0 0
    %300 = vmatpush1.bf16.msra.mxu0 0
    %301 = vmatprep.subr.bf16.mxu0 0
    %302 = vmatpush1.bf16.msra.mxu0 0
    %303 = vmatprep.subr.bf16.mxu0 0
    %304 = vmatpush1.bf16.msra.mxu0 0
    %305 = vmatprep.subr.bf16.mxu0 0
    %306 = vmatpush1.bf16.msra.mxu0 0
    %307 = vmatprep.subr.bf16.mxu0 0
    %308 = vmatpush1.bf16.msra.mxu0 0
    %309 = vmatprep.subr.bf16.mxu0 0
    %310 = vmatpush1.bf16.msra.mxu0 0
    %311 = vmatprep.mubr.bf16.mxu0 0
    %312 = vmatmul.mubr.bf16.gmra.mrb[0].mxu0 %v277
    %v313 = vpop.f32.mrb[0].mxu0
    %v314 = vadd.f32 0.0, %v313
    %v315 = vpop.f32.mrb[0].mxu0
    %v316 = vpop.f32.mrb[0].mxu0
    %v317 = vadd.f32 0.0, %v316
    %v318 = vpop.f32.mrb[0].mxu0
    %319 = vdwg.mxu0
    %v320 = vadd.f32 %v258, %v314
    %v321 = vadd.f32 %v259, %v317
    %322 = vst [vmem:[#allocation5] sm:$0xff] %v320
    %323 = vst [vmem:[#allocation5 + $0x8] sm:$0xff] %v321
    // Predicated region
    $region34: #{tpu_custom_call.1} parent=1 // pred_check
      %p324 = pneg %p245
    $region35: #{tpu_custom_call.1} parent=1 // pred_check_branch
      %326 = sbr.rel (%p324) target = $region37
    $region36: #{tpu_custom_call.1} parent=1 // pred_region
      %v327 = vld [vmem:[#allocation5] sm:$0xff]
      %v328 = vld [vmem:[#allocation5 + $0x8] sm:$0xff]
      %329 = vst [vmem:[#allocation11] sm:$0xff] %v327
      %330 = vst [vmem:[#allocation11 + $0x8] sm:$0xff] %v328
    $region37: #{tpu_custom_call.1} parent=1 // pred_fallthru
      _
    // Predicated region
    $region38: #{tpu_custom_call.1} parent=1 // pred_check
      _
    $region39: #{tpu_custom_call.1} parent=1 // pred_check_branch
      %332 = sbr.rel (0) target = $region41
    $region40: #{tpu_custom_call.1} parent=1 // pred_region
      %s334 = ssub.s32 256, 256
      %335 = vsyncadd [#allocation8], %s334
      %s336 = sshll.u32 [#allocation11], 4
      %s337 = int_to_ptr.vmem [resolvable:$true] %s336
      %342 = dma.vmem_to_hbm [thread:$0]  %s337, 256, %s4, [#allocation8], 128, 128, 8
    $region41: #{tpu_custom_call.1} parent=1 // pred_fallthru
      _
    // Predicated region
    $region42: #{tpu_custom_call.1} parent=1 // pred_check
      _
    $region43: #{tpu_custom_call.1} parent=1 // pred_check_branch
      %344 = sbr.rel (0) target = $region45
    $region44: #{tpu_custom_call.1} parent=1 // pred_region
      %345 = dma.done [#allocation8], 256
    $region45: #{tpu_custom_call.1} parent=1 // pred_fallthru
      _
    %346 = vsyncpa [#allocation7], 1
    %347 = vsyncpa [#allocation8], 1
    %348 = vsyncpa [#allocation9], 1
  %349 = vsyncmov [#allocation4]
  %s350 = vpop.sfrf %349
  %p351 = scmp.eq.s32.totalorder %s350, 0
  %p352 = pneg %p351
  %354 = shalt.err (%p352)

</llo_original>
